<compile_context>
chip_gen: v7x
topology: tpu7x:2x2x1
jax: 0.10.0
libtpu: 0.0.40
codegen_flags: <defaults>
</compile_context>

<pallas_src>
import functools

import numpy as np
import jax
import jax.numpy as jnp
from jax.experimental import pallas as pl
from jax.experimental.pallas import tpu as pltpu


def _spatial_softmax_kernel(coords_ref, logit_ref, out_ref, *, inv_temp):
    """Fused softmax + expected-coordinate reduction for one row block.

    coords_ref : (8, HW)  resident constants, rows = [x, y, 1, 0, 0, 0, 0, 0]
    logit_ref  : (TM, HW) block of flattened logits (rows = (n, c) pairs)
    out_ref    : (2, TM)  row 0 = x, row 1 = y (lane-dense output block)
    """
    l = logit_ref[...].astype(jnp.float32)          # f32 compute everywhere
    m = jnp.max(l, axis=-1, keepdims=True)          # XLU row max
    z = l - m                                       # <= 0 -> exp() <= 1, so even the
                                                    # garbage rows of a partial last
                                                    # block stay finite; they only feed
                                                    # padded output columns that are
                                                    # masked on writeback.
    if inv_temp is not None:                        # trace-time branch: free for T == 1
        z = z * jnp.float32(inv_temp)
    e = jnp.exp(z)                                  # EUP

    # One MXU matmul replaces e*x, e*y and the three cross-lane row sums.
    # coords (8, HW) contracted with e (TM, HW) over HW -> (8, TM); this is the
    # A @ B^T ("NT") form used by attention kernels, so the row axis of the
    # result lands on lanes.
    sums = jax.lax.dot_general(
        coords_ref[...], e,
        dimension_numbers=(((1,), (1,)), ((), ())),
        preferred_element_type=jnp.float32,
    )                                               # (8, TM): [xnum; ynum; denom; 0...]

    inv_denom = 1.0 / sums[2:3, :]                  # (1, TM); denom >= 1 always
    out_ref[...] = (sums[0:2, :] * inv_denom).astype(out_ref.dtype)   # (2, TM)


def spatial_softmax(logit, temperature=1.0):
    """JAX/Pallas equivalent of SpatialSoftmax.forward.

    logit: (N, C, H, W). Returns float32 (N, C, 2) with (x, y) expected
    coordinates, x over the width axis and y over the height axis, in [-1, 1].
    """
    N, C, H, W = logit.shape
    M = N * C
    HW = H * W

    # Contiguous reshape -> metadata only, no extra HBM pass.
    flat = logit.reshape(M, HW)

    # Constant matrix for the in-kernel matmul (flattened row-major (H, W)):
    #   row 0: x coordinate of each flat pixel (tiled linspace over W)
    #   row 1: y coordinate of each flat pixel (repeated linspace over H)
    #   row 2: ones (softmax denominator)
    #   rows 3-7: zero padding so the matmul LHS has an aligned 8-row sublane dim.
    lin_w = jnp.linspace(-1.0, 1.0, W, dtype=jnp.float32)
    lin_h = jnp.linspace(-1.0, 1.0, H, dtype=jnp.float32)
    coords = jnp.zeros((8, HW), dtype=jnp.float32)
    coords = coords.at[0].set(jnp.tile(lin_w, H))
    coords = coords.at[1].set(jnp.repeat(lin_h, W))
    coords = coords.at[2].set(1.0)

    itemsize = jnp.dtype(logit.dtype).itemsize

    # VMEM working set per grid step:
    #   2 * tm*HW*itemsize  double-buffered logits block (native dtype)
    # + ~2 * tm*HW*4        live f32 intermediates (l, e) in the kernel body
    # Budget ~24 MiB so it fits every generation once vmem_limit_bytes is
    # raised, with ample headroom under v7x's 64 MiB physical VMEM.
    per_row_vmem = HW * (2 * itemsize + 2 * 4)
    tm_budget = max(1, (24 * 1024 * 1024) // per_row_vmem)

    if M <= 128:
        tm = M                                    # single tiny block (full-dim blocks)
    else:
        tm = min(tm_budget, pl.cdiv(M, 2))        # >= 2 grid steps so both v7x TCs work
        tm = max(128, (tm // 128) * 128)          # lane-dense (2, tm) out block: %128
        # TODO(synk): for HW so large that a 128-row block overflows VMEM
        # (> ~32K pixels), the softmax axis itself would need tiling (2-pass).

    grid = (pl.cdiv(M, tm),)

    est_vmem = (2 * tm * HW * itemsize            # double-buffered logits
                + 2 * tm * HW * 4                 # f32 intermediates
                + 8 * HW * 4 + 2 * 2 * tm * 4     # coords + output blocks
                + (2 << 20))                      # slack
    vmem_limit = int(min(max(est_vmem, 16 * 1024 * 1024), 60 * 1024 * 1024))

    cost = pl.CostEstimate(
        flops=2 * 8 * M * HW + 2 * M * HW,
        transcendentals=M * HW,
        bytes_accessed=M * HW * itemsize + 2 * M * 4 + 8 * HW * 4,
    )

    inv_temp = None if float(temperature) == 1.0 else 1.0 / float(temperature)

    out = pl.pallas_call(
        functools.partial(_spatial_softmax_kernel, inv_temp=inv_temp),
        out_shape=jax.ShapeDtypeStruct((2, M), jnp.float32),
        grid=grid,
        in_specs=[
            pl.BlockSpec((8, HW), lambda i: (0, 0)),    # coords: resident in VMEM
            pl.BlockSpec((tm, HW), lambda i: (i, 0)),   # logits: pipelined stream
        ],
        out_specs=pl.BlockSpec((2, tm), lambda i: (0, i)),
        compiler_params=pltpu.CompilerParams(
            dimension_semantics=("parallel",),          # shards rows across TCs on v7x
            vmem_limit_bytes=vmem_limit,
        ),
        cost_estimate=cost,
    )(coords, flat)

    # (2, M) -> (N, C, 2): tiny wrapper-side transpose (x = out[0], y = out[1]).
    return out.T.reshape(N, C, 2)


if __name__ == "__main__":
    key = jax.random.PRNGKey(0)
    N, C, H, W = 2, 4, 16, 16

    logit = jax.random.normal(key, (N, C, H, W), dtype=jnp.float32) * 3.0

    def reference(x, temperature):
        n, c, h, w = x.shape
        flat = x.reshape(n, c, h * w)
        weights = jax.nn.softmax(flat / temperature, axis=-1).reshape(n, c, h, w)
        xr = (weights.sum(-2) * jnp.linspace(-1.0, 1.0, w)).sum(-1)
        yr = (weights.sum(-1) * jnp.linspace(-1.0, 1.0, h)).sum(-1)
        return jnp.stack([xr, yr], axis=-1)

    # Exercise both trace-time paths (T == 1 skips the scale multiply).
    for temperature in (1.0, 0.5):
        out = jax.block_until_ready(spatial_softmax(logit, temperature))
        ref = reference(logit, temperature)
        assert out.shape == (N, C, 2) and out.dtype == jnp.float32
        # Tolerance allows for the MXU's f32 matmul pass decomposition; any
        # semantic error (axis swap, wrong grid, wrong softmax axis) is O(0.1+).
        np.testing.assert_allclose(
            np.asarray(out), np.asarray(ref), rtol=1e-3, atol=1e-3
        )

    print("KERNEL_OK")
</pallas_src>

<mosaic_0001>
module attributes {stable_mosaic.version = 11 : i64} {
  func.func @_spatial_softmax_kernel(%arg0: i32, %arg1: memref<8x256xf32, #tpu.memory_space<vmem>>, %arg2: memref<8x256xf32, #tpu.memory_space<vmem>>, %arg3: memref<2x8xf32, #tpu.memory_space<vmem>>) attributes {dimension_semantics = [#tpu.dimension_semantics<parallel>], iteration_bounds = array<i64: 1>, scalar_prefetch = 0 : i64, scratch_operands = 0 : i64, tpu.core_type = #tpu.core_type<tc>, window_params = [{pipeline_mode = #tpu.pipeline_mode<synchronous>, transform_indices = @transform_0, window_bounds = array<i64: 8, 256>}, {transform_indices = @transform_1, window_bounds = array<i64: 8, 256>}, {transform_indices = @transform_2, window_bounds = array<i64: 2, 8>}]} {
    %c0 = arith.constant 0 : index
    %c0_0 = arith.constant 0 : index
    %0 = vector.load %arg2[%c0, %c0_0] : memref<8x256xf32, #tpu.memory_space<vmem>>, vector<8x256xf32>
    %cst = arith.constant dense<0xFF800000> : vector<8xf32>
    %1 = vector.multi_reduction <maximumf>, %0, %cst [1] : vector<8x256xf32> to vector<8xf32>
    %2 = vector.shape_cast %1 : vector<8xf32> to vector<8x1xf32>
    %3 = vector.broadcast %2 : vector<8x1xf32> to vector<8x256xf32>
    %4 = arith.subf %0, %3 : vector<8x256xf32>
    %5 = math.exp %4 : vector<8x256xf32>
    %c0_1 = arith.constant 0 : index
    %c0_2 = arith.constant 0 : index
    %6 = vector.load %arg1[%c0_1, %c0_2] : memref<8x256xf32, #tpu.memory_space<vmem>>, vector<8x256xf32>
    %cst_3 = arith.constant dense<0.000000e+00> : vector<8x8xf32>
    %7 = tpu.matmul %6, %5, %cst_3 {dimension_numbers = #tpu.dot_dimension_numbers<[1], [1], [0], [0], [0, 0, 1, 0], [], []>} : vector<8x256xf32>, vector<8x256xf32>, vector<8x8xf32> -> vector<8x8xf32>
    %8 = vector.extract_strided_slice %7 {offsets = [2, 0], sizes = [1, 8], strides = [1, 1]} : vector<8x8xf32> to vector<1x8xf32>
    %cst_4 = arith.constant 1.000000e+00 : f32
    %9 = vector.broadcast %cst_4 : f32 to vector<1x8xf32>
    %10 = arith.divf %9, %8 : vector<1x8xf32>
    %11 = vector.extract_strided_slice %7 {offsets = [0, 0], sizes = [2, 8], strides = [1, 1]} : vector<8x8xf32> to vector<2x8xf32>
    %12 = vector.broadcast %10 : vector<1x8xf32> to vector<2x8xf32>
    %13 = arith.mulf %11, %12 : vector<2x8xf32>
    %c0_5 = arith.constant 0 : index
    %c0_6 = arith.constant 0 : index
    %14 = vector.load %arg3[%c0_5, %c0_6] : memref<2x8xf32, #tpu.memory_space<vmem>>, vector<2x8xf32>
    tpu.vector_store %arg3[%c0_5, %c0_6], %13 {strides = array<i32>} : memref<2x8xf32, #tpu.memory_space<vmem>>, vector<2x8xf32>,
    return
  }
  func.func @transform_0(%arg0: i32) -> (i32, i32) {
    %c0_i32 = arith.constant 0 : i32
    %c0_i32_0 = arith.constant 0 : i32
    %c0_i32_1 = arith.constant 0 : i32
    return %c0_i32, %c0_i32_0 : i32, i32
  }
  func.func @transform_1(%arg0: i32) -> (i32, i32) {
    %c0_i32 = arith.constant 0 : i32
    %c0_i32_0 = arith.constant 0 : i32
    return %arg0, %c0_i32 : i32, i32
  }
  func.func @transform_2(%arg0: i32) -> (i32, i32) {
    %c0_i32 = arith.constant 0 : i32
    %c0_i32_0 = arith.constant 0 : i32
    return %c0_i32, %arg0 : i32, i32
  }
}

</mosaic_0001>

<llo_original>
// kernel: tpu_custom_call.1
$region0: #{tpu_custom_call.1}
  #allocation0 [shape = 'u32[]', space=smem, size = 0x4, offset = 0x4, fixed_abs, tag = 'smem constant byte address 0x4 - core index']
  #allocation1 [shape = 'u32[144,128]{1,0:T(1,128)}', space=vmem, size = 0x12000, scoped, tag = 'internal scratch']
  %s0 = inlined_call_operand.hbm [shape: f32[8,256], index: 0, kind: input, shape index: {}]
  %s1 = inlined_call_operand.hbm [shape: f32[8,256], index: 1, kind: input, shape index: {}]
  %s2 = inlined_call_operand.hbm [shape: f32[2,8], index: 2, kind: output, shape index: {}]
  %s3 = sld [smem:[#allocation0]]
  $region26: #{tpu_custom_call.1} parent=0
    _
  %s5 = ssub.s32 1, %s3
  %s6 = scalar_select 0, %s5, %s3
  $region1: #{tpu_custom_call.1} parent=0
    #allocation2 [shape = 'u8[8192]{0}', space=vmem, size = 0x2000, scoped, tag = 'input window, operand 0, single buffered']
    #allocation3 [shape = 's32[1]{0}', space=sflag, size = 0x4, scoped, tag = 'scoped memory for tpu_custom_call.1']
    #allocation4 [shape = 's32[1]{0}', space=sflag, size = 0x4, scoped, tag = 'scoped memory for tpu_custom_call.1']
    #allocation5 [shape = 'u8[8192]{0}', space=vmem, size = 0x2000, scoped, tag = 'input window, operand 1, single buffered']
    #allocation6 [shape = 's32[1]{0}', space=sflag, size = 0x4, scoped, tag = 'scoped memory for tpu_custom_call.1']
    #allocation7 [shape = 'u8[1024]{0}', space=vmem, size = 0x400, scoped, tag = 'output window, operand 0, single buffered']
    %7 = vsyncpa [#allocation3], 0
    %8 = vsyncpa [#allocation6], 0
    %9 = vsyncpa [#allocation4], 0
    // Predicated region
    $region2: #{tpu_custom_call.1} parent=1 // pred_check
      _
    $region3: #{tpu_custom_call.1} parent=1 // pred_check_branch
      %11 = sbr.rel (0) target = $region5
    $region4: #{tpu_custom_call.1} parent=1 // pred_region
      %s13 = ssub.s32 256, 256
      %14 = vsyncadd [#allocation3], %s13
      %s16 = sshll.u32 [#allocation2], 4
      %s17 = int_to_ptr.vmem [resolvable:$true] %s16
      %19 = dma.hbm_to_vmem [thread:$0]  %s0, 256, %s17, [#allocation3]
    $region5: #{tpu_custom_call.1} parent=1 // pred_fallthru
      _
    // Predicated region
    $region6: #{tpu_custom_call.1} parent=1 // pred_check
      _
    $region7: #{tpu_custom_call.1} parent=1 // pred_check_branch
      %21 = sbr.rel (0) target = $region9
    $region8: #{tpu_custom_call.1} parent=1 // pred_region
      %s23 = ssub.s32 256, 256
      %24 = vsyncadd [#allocation6], %s23
      %s26 = sshll.u32 [#allocation5], 4
      %s27 = int_to_ptr.vmem [resolvable:$true] %s26
      %29 = dma.hbm_to_vmem [thread:$0]  %s1, 256, %s27, [#allocation6]
    $region9: #{tpu_custom_call.1} parent=1 // pred_fallthru
      _
    // Predicated region
    $region10: #{tpu_custom_call.1} parent=1 // pred_check
      _
    $region11: #{tpu_custom_call.1} parent=1 // pred_check_branch
      %31 = sbr.rel (0) target = $region13
    $region12: #{tpu_custom_call.1} parent=1 // pred_region
      %32 = dma.done [#allocation3], 256
    $region13: #{tpu_custom_call.1} parent=1 // pred_fallthru
      _
    // Predicated region
    $region14: #{tpu_custom_call.1} parent=1 // pred_check
      _
    $region15: #{tpu_custom_call.1} parent=1 // pred_check_branch
      %34 = sbr.rel (0) target = $region17
    $region16: #{tpu_custom_call.1} parent=1 // pred_region
      %35 = dma.done [#allocation6], 256
    $region17: #{tpu_custom_call.1} parent=1 // pred_fallthru
      _
    %v36 = vld [vmem:[#allocation5] sm:$0xff]
    %v37 = vld [vmem:[#allocation5 + $0x8] sm:$0xff]
    %v38 = vmax.f32 %v36, %v37
    %39 = vmax.xlane.f32.xlu0 %v38
    %v40 = vpop.xlane.xlu0 %39
    %v41 = vsub.f32 %v36, %v40
    %v42 = vsub.f32 %v37, %v40
    %v43 = vmul.f32 %v41, 1.442695
    %v44 = vpow.pop %v43
    %v45 = vmul.f32 %v42, 1.442695
    %v46 = vpow.pop %v45
    %v47 = vld [vmem:[#allocation2] sm:$0xff]
    %v48 = vld [vmem:[#allocation2 + $0x8] sm:$0xff]
    %49 = vmatprep.subr.mxu0 %v46
    %50 = vmatpush1.xpose.msra.mxu0 %v44
    %51 = vmatprep.subr.mxu0 0.0
    %52 = vmatpush1.xpose.msra.mxu0 0.0
    %53 = vmatprep.subr.mxu0 0.0
    %54 = vmatpush1.xpose.msra.mxu0 0.0
    %55 = vmatprep.subr.mxu0 0.0
    %56 = vmatpush1.xpose.msra.mxu0 0.0
    %57 = vmatprep.subr.mxu0 0.0
    %58 = vmatpush1.xpose.msra.mxu0 0.0
    %59 = vmatprep.subr.mxu0 0.0
    %60 = vmatpush1.xpose.msra.mxu0 0.0
    %61 = vmatprep.subr.mxu0 0.0
    %62 = vmatpush1.xpose.msra.mxu0 0.0
    %63 = vmatprep.subr.mxu0 0.0
    %64 = vmatpush1.xpose.msra.mxu0 0.0
    %65 = vmatprep.subr.mxu0 0.0
    %66 = vmatpush1.xpose.msra.mxu0 0.0
    %67 = vmatprep.subr.mxu0 0.0
    %68 = vmatpush1.xpose.msra.mxu0 0.0
    %69 = vmatprep.subr.mxu0 0.0
    %70 = vmatpush1.xpose.msra.mxu0 0.0
    %71 = vmatprep.subr.mxu0 0.0
    %72 = vmatpush1.xpose.msra.mxu0 0.0
    %73 = vmatprep.subr.mxu0 0.0
    %74 = vmatpush1.xpose.msra.mxu0 0.0
    %75 = vmatprep.subr.mxu0 0.0
    %76 = vmatpush1.xpose.msra.mxu0 0.0
    %77 = vmatprep.subr.mxu0 0.0
    %78 = vmatpush1.xpose.msra.mxu0 0.0
    %79 = vmatprep.subr.mxu0 0.0
    %80 = vmatpush1.xpose.msra.mxu0 0.0
    %81 = vmatprep.subr.mxu0 0.0
    %82 = vmatpush1.xpose.msra.mxu0 0.0
    %83 = vmatprep.subr.mxu0 0.0
    %84 = vmatpush1.xpose.msra.mxu0 0.0
    %85 = vmatprep.subr.mxu0 0.0
    %86 = vmatpush1.xpose.msra.mxu0 0.0
    %87 = vmatprep.subr.mxu0 0.0
    %88 = vmatpush1.xpose.msra.mxu0 0.0
    %89 = vmatprep.subr.mxu0 0.0
    %90 = vmatpush1.xpose.msra.mxu0 0.0
    %91 = vmatprep.subr.mxu0 0.0
    %92 = vmatpush1.xpose.msra.mxu0 0.0
    %93 = vmatprep.subr.mxu0 0.0
    %94 = vmatpush1.xpose.msra.mxu0 0.0
    %95 = vmatprep.subr.mxu0 0.0
    %96 = vmatpush1.xpose.msra.mxu0 0.0
    %97 = vmatprep.subr.mxu0 0.0
    %98 = vmatpush1.xpose.msra.mxu0 0.0
    %99 = vmatprep.subr.mxu0 0.0
    %100 = vmatpush1.xpose.msra.mxu0 0.0
    %101 = vmatprep.subr.mxu0 0.0
    %102 = vmatpush1.xpose.msra.mxu0 0.0
    %103 = vmatprep.subr.mxu0 0.0
    %104 = vmatpush1.xpose.msra.mxu0 0.0
    %105 = vmatprep.subr.mxu0 0.0
    %106 = vmatpush1.xpose.msra.mxu0 0.0
    %107 = vmatprep.subr.mxu0 0.0
    %108 = vmatpush1.xpose.msra.mxu0 0.0
    %109 = vmatprep.subr.mxu0 0.0
    %110 = vmatpush1.xpose.msra.mxu0 0.0
    %111 = vmatprep.subr.mxu0 0.0
    %112 = vmatpush1.xpose.msra.mxu0 0.0
    %113 = vmatprep.mubr.f32.mxu0 %v48
    %114 = vmatmul.mubr.f32.gmra.mrb[0].mxu0 %v47
    %v115 = vpop.f32.mrb[0].mxu0
    %v116 = vadd.f32 0.0, %v115
    %v117 = vpop.f32.mrb[0].mxu0
    %118 = vdwg.mxu0
    %v119 = vrcp.pop %v116
    %v120 = vmul.f32 1.0, %v119
    %v121 = vlaneseq
    %v122 = vshrl.u32 %v121, 7
    %v123 = vsub.s32 2, %v122
    %v124 = vrot.slane %v120, %v123
    %v125 = vmul.f32 %v116, %v124
    %vm126 = vcmask 58368
    %127 = vst.msk [vmem:[#allocation7] sm:$0x3] %vm126, %v125
    // Predicated region
    $region18: #{tpu_custom_call.1} parent=1 // pred_check
      _
    $region19: #{tpu_custom_call.1} parent=1 // pred_check_branch
      %129 = sbr.rel (0) target = $region21
    $region20: #{tpu_custom_call.1} parent=1 // pred_region
      %s131 = ssub.s32 32, 32
      %132 = vsyncadd [#allocation4], %s131
      %s134 = sshll.u32 [#allocation7], 4
      %s135 = int_to_ptr.vmem [resolvable:$true] %s134
      %137 = dma.vmem_to_hbm [thread:$0]  %s135, 32, %s2, [#allocation4]
    $region21: #{tpu_custom_call.1} parent=1 // pred_fallthru
      _
    // Predicated region
    $region22: #{tpu_custom_call.1} parent=1 // pred_check
      _
    $region23: #{tpu_custom_call.1} parent=1 // pred_check_branch
      %139 = sbr.rel (0) target = $region25
    $region24: #{tpu_custom_call.1} parent=1 // pred_region
      %140 = dma.done [#allocation4], 32
    $region25: #{tpu_custom_call.1} parent=1 // pred_fallthru
      _
    %141 = vsyncpa [#allocation3], 1
    %142 = vsyncpa [#allocation6], 1
    %143 = vsyncpa [#allocation4], 1

</llo_original>
